<compile_context>
chip_gen: v6e
topology: v6e:2x2x1
jax: 0.10.0
libtpu: 0.0.40
codegen_flags: <defaults>
</compile_context>

<pallas_src>
import jax
import jax.numpy as jnp
import numpy as np
from jax.experimental import pallas as pl
from jax.experimental.pallas import tpu as pltpu


def _round_up(n, m):
    return ((n + m - 1) // m) * m


def _make_kernel(C, qk_pad):
    """Kernel over one batch item: (1, C, N) x-block -> (1, C+L, N) out-block."""

    def kernel(x_ref, w_ref, b_ref, u_ref, gamma_ref, o_ref):
        gamma = gamma_ref[0]                 # scalar from 1-D SMEM ref
        x = x_ref[0]                         # (C, N) f32

        # Fused projection (tiny, f32): one MXU matmul yields q, k, v and the
        # constant-ones row.
        qkv = jnp.dot(w_ref[...], x, preferred_element_type=jnp.float32) + b_ref[...]

        # bf16 MXU operands (accumulation stays f32): faster MXU on v6e/v7x,
        # half the vreg/VMEM footprint of the big (N, N) intermediate on v5e.
        q = qkv[0:qk_pad, :].astype(jnp.bfloat16)        # (qk_pad, N); pad rows == 0
        k = qkv[qk_pad:2 * qk_pad, :].astype(jnp.bfloat16)
        vv = qkv[2 * qk_pad:, :]                         # (v_pad, N): rows [0:C]=v, row C == 1.0

        # energy[i, j] = sum_c q[c, i] * k[c, j]   (zero-padded rows contribute 0)
        energy = jax.lax.dot_general(
            q, k, (((0,), (0,)), ((), ())),
            preferred_element_type=jnp.float32)                      # (N, N) f32

        m = jnp.max(energy, axis=-1, keepdims=True)
        # exp stays f32 (safe on v5e's f32-only EUP); cast only the MXU operand.
        p = jnp.exp(energy - m).astype(jnp.bfloat16)                 # (N, N) bf16

        # ov[c, i] = sum_j vv[c, j] * p[i, j]; row C is the softmax denominator.
        ov = jax.lax.dot_general(
            vv.astype(jnp.bfloat16), p, (((1,), (1,)), ((), ())),
            preferred_element_type=jnp.float32)                      # (v_pad, N) f32

        inv = pl.reciprocal(ov[C:C + 1, :], approx=True)             # (1, N), EUP
        y = gamma * (ov[:C, :] * inv) + x                            # (C, N)

        o_ref[0, :C, :] = y.astype(o_ref.dtype)
        # Embedding pass-through (L rows). Negligible at L=2.
        # TODO(synk): route via memory_space=pl.ANY + make_async_copy if L grows.
        o_ref[0, C:, :] = u_ref[0].astype(o_ref.dtype)

    return kernel


def pack_params(params):
    """One-time packing of Wq/Wk/Wv (+biases, +ones row) into one (COP, C) weight.

    Call once after parameter init, NOT inside the jitted forward.

    INVARIANT: every row not explicitly written below must stay exactly zero
    (zero weight AND zero bias).  The padded q/k rows then contribute nothing
    to the energy, padded v rows nothing to the output, and row 2*qk_pad + C
    (zero weight, bias 1.0) is the constant-ones row whose attention-weighted
    sum is the softmax denominator.
    """
    C = params["wv"].shape[0]
    C8 = params["wq"].shape[0]
    qk_pad = _round_up(max(C8, 1), 8)            # sublane-aligned q / k slots
    v_pad = _round_up(C + 1, 8)                  # v rows + 1 ones row
    cop = 2 * qk_pad + v_pad

    w = jnp.zeros((cop, C), jnp.float32)
    w = w.at[0:C8, :].set(params["wq"].astype(jnp.float32))
    w = w.at[qk_pad:qk_pad + C8, :].set(params["wk"].astype(jnp.float32))
    w = w.at[2 * qk_pad:2 * qk_pad + C, :].set(params["wv"].astype(jnp.float32))

    b = jnp.zeros((cop, 1), jnp.float32)
    b = b.at[0:C8, 0].set(params["bq"].astype(jnp.float32))
    b = b.at[qk_pad:qk_pad + C8, 0].set(params["bk"].astype(jnp.float32))
    b = b.at[2 * qk_pad:2 * qk_pad + C, 0].set(params["bv"].astype(jnp.float32))
    b = b.at[2 * qk_pad + C, 0].set(1.0)         # ones row -> softmax denominator

    return {
        "w": w,
        "b": b,
        "gamma": jnp.reshape(params["gamma"], (1,)).astype(jnp.float32),
        "emb": params["emb"].astype(jnp.float32),
    }


def conditional_self_attention(x_nchw, label, packed):
    """Forward pass matching ConditionalSelfAttention.forward.

    x_nchw: (B, C, W, H) float32
    label:  (B, L) int32 indices in [0, W*H)
    packed: output of pack_params()
    returns (B, C + L, W, H) float32
    """
    B, C, W, H = x_nchw.shape
    N = W * H
    L = label.shape[1]

    C8 = max(C // 8, 1)
    qk_pad = _round_up(C8, 8)
    cop = packed["w"].shape[0]

    # NCHW -> (B, C, N): pure reshape, spatial already contiguous last.
    x_cn = x_nchw.reshape(B, C, N)

    # Embedding gather (data-movement glue); its result is written by the kernel
    # straight into the output block, so there is no separate concat copy.
    u = jnp.take(packed["emb"], label, axis=0)          # (B, L, N)

    kernel = _make_kernel(C, qk_pad)
    out = pl.pallas_call(
        kernel,
        out_shape=jax.ShapeDtypeStruct((B, C + L, N), jnp.float32),
        grid=(B,),
        in_specs=[
            pl.BlockSpec((1, C, N), lambda g: (g, 0, 0)),       # x (per-batch block)
            pl.BlockSpec((cop, C), lambda g: (0, 0)),           # packed weights (resident)
            pl.BlockSpec((cop, 1), lambda g: (0, 0)),           # packed biases (resident)
            pl.BlockSpec((1, L, N), lambda g: (g, 0, 0)),       # embedded labels
            pl.BlockSpec(memory_space=pltpu.MemorySpace.SMEM),  # gamma (1,)
        ],
        out_specs=pl.BlockSpec((1, C + L, N), lambda g: (g, 0, 0)),
        compiler_params=pltpu.CompilerParams(
            dimension_semantics=("parallel",)),
    )(x_cn, packed["w"], packed["b"], u, packed["gamma"])

    return out.reshape(B, C + L, W, H)


def _reference(x_nchw, label, params):
    """Pure-JAX reference matching the PyTorch module math."""
    B, C, W, H = x_nchw.shape
    N = W * H
    L = label.shape[1]
    x_cn = x_nchw.reshape(B, C, N)
    q = jnp.einsum("oc,bcn->bon", params["wq"], x_cn) + params["bq"][None, :, None]
    k = jnp.einsum("oc,bcn->bon", params["wk"], x_cn) + params["bk"][None, :, None]
    v = jnp.einsum("oc,bcn->bon", params["wv"], x_cn) + params["bv"][None, :, None]
    energy = jnp.einsum("bci,bcj->bij", q, k)
    attn = jax.nn.softmax(energy, axis=-1)
    out = jnp.einsum("bcj,bij->bci", v, attn)
    y = params["gamma"] * out + x_cn
    u = jnp.take(params["emb"], label, axis=0)
    return jnp.concatenate(
        [y.reshape(B, C, W, H), u.reshape(B, L, W, H)], axis=1)


def init_params(key, in_dim, shape):
    """Deterministic parameter init matching the module's shapes.

    query/key conv: Conv2d(in_dim, in_dim//8, 1) -> weight stored as (out, in).
    value conv:     Conv2d(in_dim, in_dim, 1)    -> weight (in_dim, in_dim).
    gamma: scalar (PyTorch inits to 0; we use 0.5 so the attention path is live).
    embedding: Embedding(W*H, W*H) -> table (W*H, W*H).
    """
    C = in_dim
    C8 = in_dim // 8
    NE = shape[0] * shape[1]
    ks = jax.random.split(key, 7)
    return {
        "wq": jax.random.normal(ks[0], (C8, C), jnp.float32) * 0.1,
        "bq": jax.random.normal(ks[1], (C8,), jnp.float32) * 0.1,
        "wk": jax.random.normal(ks[2], (C8, C), jnp.float32) * 0.1,
        "bk": jax.random.normal(ks[3], (C8,), jnp.float32) * 0.1,
        "wv": jax.random.normal(ks[4], (C, C), jnp.float32) * 0.1,
        "bv": jax.random.normal(ks[5], (C,), jnp.float32) * 0.1,
        "gamma": jnp.float32(0.5),
        "emb": jax.random.normal(ks[6], (NE, NE), jnp.float32) * 0.1,
    }


if __name__ == "__main__":
    B, C, W, H = 2, 16, 16, 16      # in_dim=16 (so C//8 = 2), shape=(16,16)
    L = 2                           # label sequence length
    shape = (W, H)

    key = jax.random.PRNGKey(0)
    kx, kl, kp = jax.random.split(key, 3)

    x = jax.random.normal(kx, (B, C, W, H), jnp.float32)
    label = jax.random.randint(kl, (B, L), 0, W * H, jnp.int32)
    params = init_params(kp, C, shape)

    # One-time weight packing (not part of the per-call forward).
    packed = pack_params(params)

    fwd = jax.jit(conditional_self_attention)
    out = fwd(x, label, packed)
    out = jax.block_until_ready(out)

    ref = _reference(x, label, params)
    assert out.shape == (B, C + L, W, H), out.shape
    # Tolerance relaxed vs 1e-5 because the kernel uses bf16 MXU operands for the
    # energy / attn x v matmuls (f32 accumulation) and an approximate (EUP)
    # reciprocal for the softmax normalization.
    np.testing.assert_allclose(np.asarray(out), np.asarray(ref),
                               rtol=5e-3, atol=5e-3)

    print("KERNEL_OK")
</pallas_src>

<mosaic_0001>
module attributes {stable_mosaic.version = 11 : i64} {
  func.func @kernel(%arg0: i32, %arg1: memref<1x16x256xf32, #tpu.memory_space<vmem>>, %arg2: memref<40x16xf32, #tpu.memory_space<vmem>>, %arg3: memref<40x1xf32, #tpu.memory_space<vmem>>, %arg4: memref<1x2x256xf32, #tpu.memory_space<vmem>>, %arg5: memref<1xf32, #tpu.memory_space<smem>>, %arg6: memref<1x18x256xf32, #tpu.memory_space<vmem>>) attributes {dimension_semantics = [#tpu.dimension_semantics<parallel>], iteration_bounds = array<i64: 2>, scalar_prefetch = 0 : i64, scratch_operands = 0 : i64, tpu.core_type = #tpu.core_type<tc>, window_params = [{transform_indices = @transform_0, window_bounds = array<i64: 1, 16, 256>}, {pipeline_mode = #tpu.pipeline_mode<synchronous>, transform_indices = @transform_1, window_bounds = array<i64: 40, 16>}, {pipeline_mode = #tpu.pipeline_mode<synchronous>, transform_indices = @transform_2, window_bounds = array<i64: 40, 1>}, {transform_indices = @transform_3, window_bounds = array<i64: 1, 2, 256>}, {transform_indices = @transform_4, window_bounds = array<i64: 1>}, {transform_indices = @transform_5, window_bounds = array<i64: 1, 18, 256>}]} {
    %c0 = arith.constant 0 : index
    %0 = memref.load %arg5[%c0] : memref<1xf32, #tpu.memory_space<smem>>
    %c0_0 = arith.constant 0 : index
    %c0_1 = arith.constant 0 : index
    %c0_2 = arith.constant 0 : index
    %1 = vector.load %arg1[%c0_0, %c0_1, %c0_2] : memref<1x16x256xf32, #tpu.memory_space<vmem>>, vector<1x16x256xf32>
    %2 = vector.shape_cast %1 : vector<1x16x256xf32> to vector<16x256xf32>
    %c0_3 = arith.constant 0 : index
    %c0_4 = arith.constant 0 : index
    %3 = vector.load %arg2[%c0_3, %c0_4] : memref<40x16xf32, #tpu.memory_space<vmem>>, vector<40x16xf32>
    %cst = arith.constant dense<0.000000e+00> : vector<40x256xf32>
    %4 = tpu.matmul %3, %2, %cst {dimension_numbers = #tpu.dot_dimension_numbers<[1], [0], [0], [1], [0, 0, 1, 1], [], []>} : vector<40x16xf32>, vector<16x256xf32>, vector<40x256xf32> -> vector<40x256xf32>
    %c0_5 = arith.constant 0 : index
    %c0_6 = arith.constant 0 : index
    %5 = vector.load %arg3[%c0_5, %c0_6] : memref<40x1xf32, #tpu.memory_space<vmem>>, vector<40x1xf32>
    %6 = vector.broadcast %5 : vector<40x1xf32> to vector<40x256xf32>
    %7 = arith.addf %4, %6 : vector<40x256xf32>
    %8 = vector.extract_strided_slice %7 {offsets = [0, 0], sizes = [8, 256], strides = [1, 1]} : vector<40x256xf32> to vector<8x256xf32>
    %9 = arith.truncf %8 : vector<8x256xf32> to vector<8x256xbf16>
    %10 = vector.extract_strided_slice %7 {offsets = [8, 0], sizes = [8, 256], strides = [1, 1]} : vector<40x256xf32> to vector<8x256xf32>
    %11 = arith.truncf %10 : vector<8x256xf32> to vector<8x256xbf16>
    %12 = vector.extract_strided_slice %7 {offsets = [16, 0], sizes = [24, 256], strides = [1, 1]} : vector<40x256xf32> to vector<24x256xf32>
    %cst_7 = arith.constant dense<0.000000e+00> : vector<256x256xf32>
    %13 = tpu.matmul %9, %11, %cst_7 {dimension_numbers = #tpu.dot_dimension_numbers<[0], [0], [1], [1], [0, 1, 1, 1], [], []>} : vector<8x256xbf16>, vector<8x256xbf16>, vector<256x256xf32> -> vector<256x256xf32>
    %cst_8 = arith.constant dense<0xFF800000> : vector<256xf32>
    %14 = vector.multi_reduction <maximumf>, %13, %cst_8 [1] : vector<256x256xf32> to vector<256xf32>
    %15 = vector.shape_cast %14 : vector<256xf32> to vector<256x1xf32>
    %16 = vector.broadcast %15 : vector<256x1xf32> to vector<256x256xf32>
    %17 = arith.subf %13, %16 : vector<256x256xf32>
    %18 = math.exp %17 : vector<256x256xf32>
    %19 = arith.truncf %18 : vector<256x256xf32> to vector<256x256xbf16>
    %20 = arith.truncf %12 : vector<24x256xf32> to vector<24x256xbf16>
    %cst_9 = arith.constant dense<0.000000e+00> : vector<24x256xf32>
    %21 = tpu.matmul %20, %19, %cst_9 {dimension_numbers = #tpu.dot_dimension_numbers<[1], [1], [0], [0], [0, 0, 1, 0], [], []>} : vector<24x256xbf16>, vector<256x256xbf16>, vector<24x256xf32> -> vector<24x256xf32>
    %22 = vector.extract_strided_slice %21 {offsets = [16, 0], sizes = [1, 256], strides = [1, 1]} : vector<24x256xf32> to vector<1x256xf32>
    %23 = tpu.reciprocal %22 {approx = true} : vector<1x256xf32> -> vector<1x256xf32>
    %24 = vector.extract_strided_slice %21 {offsets = [0, 0], sizes = [16, 256], strides = [1, 1]} : vector<24x256xf32> to vector<16x256xf32>
    %25 = vector.broadcast %23 : vector<1x256xf32> to vector<16x256xf32>
    %26 = arith.mulf %24, %25 : vector<16x256xf32>
    %27 = vector.broadcast %0 : f32 to vector<16x256xf32>
    %28 = arith.mulf %27, %26 : vector<16x256xf32>
    %29 = arith.addf %28, %2 : vector<16x256xf32>
    %c0_10 = arith.constant 0 : index
    %c0_11 = arith.constant 0 : index
    %c0_12 = arith.constant 0 : index
    %30 = vector.load %arg6[%c0_10, %c0_11, %c0_12] : memref<1x18x256xf32, #tpu.memory_space<vmem>>, vector<1x16x256xf32>
    %31 = vector.shape_cast %30 : vector<1x16x256xf32> to vector<16x256xf32>
    %32 = vector.shape_cast %29 : vector<16x256xf32> to vector<1x16x256xf32>
    tpu.vector_store %arg6[%c0_10, %c0_11, %c0_12], %32 {strides = array<i32>} : memref<1x18x256xf32, #tpu.memory_space<vmem>>, vector<1x16x256xf32>,
    %c0_13 = arith.constant 0 : index
    %c0_14 = arith.constant 0 : index
    %c0_15 = arith.constant 0 : index
    %33 = vector.load %arg4[%c0_13, %c0_14, %c0_15] : memref<1x2x256xf32, #tpu.memory_space<vmem>>, vector<1x2x256xf32>
    %34 = vector.shape_cast %33 : vector<1x2x256xf32> to vector<2x256xf32>
    %c0_16 = arith.constant 0 : index
    %c16 = arith.constant 16 : index
    %c0_17 = arith.constant 0 : index
    %35 = vector.load %arg6[%c0_16, %c16, %c0_17] : memref<1x18x256xf32, #tpu.memory_space<vmem>>, vector<1x2x256xf32>
    %36 = vector.shape_cast %35 : vector<1x2x256xf32> to vector<2x256xf32>
    %37 = vector.shape_cast %34 : vector<2x256xf32> to vector<1x2x256xf32>
    tpu.vector_store %arg6[%c0_16, %c16, %c0_17], %37 {strides = array<i32>} : memref<1x18x256xf32, #tpu.memory_space<vmem>>, vector<1x2x256xf32>,
    return
  }
  func.func @transform_0(%arg0: i32) -> (i32, i32, i32) {
    %c0_i32 = arith.constant 0 : i32
    %c0_i32_0 = arith.constant 0 : i32
    %c0_i32_1 = arith.constant 0 : i32
    return %arg0, %c0_i32, %c0_i32_0 : i32, i32, i32
  }
  func.func @transform_1(%arg0: i32) -> (i32, i32) {
    %c0_i32 = arith.constant 0 : i32
    %c0_i32_0 = arith.constant 0 : i32
    %c0_i32_1 = arith.constant 0 : i32
    return %c0_i32, %c0_i32_0 : i32, i32
  }
  func.func @transform_2(%arg0: i32) -> (i32, i32) {
    %c0_i32 = arith.constant 0 : i32
    %c0_i32_0 = arith.constant 0 : i32
    %c0_i32_1 = arith.constant 0 : i32
    return %c0_i32, %c0_i32_0 : i32, i32
  }
  func.func @transform_3(%arg0: i32) -> (i32, i32, i32) {
    %c0_i32 = arith.constant 0 : i32
    %c0_i32_0 = arith.constant 0 : i32
    %c0_i32_1 = arith.constant 0 : i32
    return %arg0, %c0_i32, %c0_i32_0 : i32, i32, i32
  }
  func.func @transform_4(%arg0: i32) -> i32 {
    %c0_i32 = arith.constant 0 : i32
    %c0_i32_0 = arith.constant 0 : i32
    return %c0_i32 : i32
  }
  func.func @transform_5(%arg0: i32) -> (i32, i32, i32) {
    %c0_i32 = arith.constant 0 : i32
    %c0_i32_0 = arith.constant 0 : i32
    %c0_i32_1 = arith.constant 0 : i32
    return %arg0, %c0_i32, %c0_i32_0 : i32, i32, i32
  }
}

</mosaic_0001>

<llo_original>
// kernel: conditional_self_attention.1
$region0: #{conditional_self_attention.1}
  #allocation0 [shape = 'u32[]', space=smem, size = 0x4, offset = 0x4, fixed_abs, tag = 'smem constant byte address 0x4 - core index']
  #allocation1 [shape = 'u32[144,128]{1,0:T(1,128)}', space=vmem, size = 0x12000, scoped, tag = 'internal scratch']
  #allocation2 [shape = 'f32[1]{0:T(128)S(6)}', space=smem, size = 0x200, scoped, tag = 'scoped memory for conditional_self_attention.1']
  %s0 = inlined_call_operand.vmem [shape: f32[2,16,256], index: 0, kind: input, shape index: {}]
  %s1 = inlined_call_operand.vmem [shape: f32[40,16], index: 1, kind: input, shape index: {}]
  %s2 = inlined_call_operand.vmem [shape: f32[40,1], index: 2, kind: input, shape index: {}]
  %s3 = inlined_call_operand.vmem [shape: f32[2,2,256], index: 3, kind: input, shape index: {}]
  %s4 = inlined_call_operand.<no memory space> [shape: f32[1], index: 4, kind: input, shape index: {}]
  %s5 = inlined_call_operand.vmem [shape: f32[2,18,256], index: 5, kind: output, shape index: {}]
  %s6 = sld [smem:[#allocation0]]
  $region53: #{conditional_self_attention.1} parent=0
    _
  %s8 = ssub.s32 1, %s6
  %s9 = scalar_select 0, %s8, %s6
  %10 = sst [smem:[#allocation2]] %s4
  loop: start=0, step=1, limit=4
  $region2: #{conditional_self_attention.1} parent=0 // loop_pre_header
    _
  $region3: #{conditional_self_attention.1} parent=0 // loop_header
    %s12 = sphi 0, %s16
    %p13 = scmp.ge.s32.totalorder %s12, 4
    %s22 = sphi 0, %s24
    %s25 = sphi 0, %s22
    %s26 = sphi 0, %s25
    %s42 = sphi 0, %s26
    %s46 = sphi 0, %s46
    %s48 = sphi 0, %s46
    %s49 = sphi 0, %s48
    %s63 = sphi 0, %s49
    %s67 = sphi 0, %s67
    %s69 = sphi 0, %s67
    %s70 = sphi 0, %s69
    %s84 = sphi 0, %s70
    %s90 = sphi 0, %s92
    %s93 = sphi 0, %s90
    %s94 = sphi 0, %s93
    %s110 = sphi 0, %s94
    %s114 = sphi 0, %s114
    %s116 = sphi 0, %s114
    %s117 = sphi 0, %s116
    %s131 = sphi 0, %s117
    %s137 = sphi 0, %s139
    %s140 = sphi 0, %s137
    %s141 = sphi 0, %s140
    %s157 = sphi 0, %s141
  $region4: #{conditional_self_attention.1} parent=0 // loop_header_branch
    %15 = sbr.rel (%p13) target = $region8
  $region5: #{conditional_self_attention.1} parent=0 // loop_body
    %s17 = ssub.s32 %s12, 1
    %s18 = ssub.s32 %s12, 2
    %s19 = sadd.s32 %s12, 1
    %s20 = ssub.s32 %s12, %s19
    %p21 = scmp.eq.s32.totalorder %s20, 0
    %s23 = sadd.s32 %s22, 1
    %s24 = scalar_select %p21, %s22, %s23
    %p27 = pneg %p21
    %p28 = scmp.eq.s32.totalorder %s12, 1
    %p29 = por %p27, %p28
    %p30 = scmp.ne.s32.totalorder %s22, %s25
    %p31 = scmp.eq.s32.totalorder %s12, 0
    %p32 = por %p30, %p31
    %p33 = scmp.ne.s32.totalorder %s22, %s25
    %p34 = scmp.eq.s32.totalorder %s17, 1
    %p35 = por %p33, %p34
    %p36 = scmp.ne.s32.totalorder %s25, %s26
    %p37 = scmp.eq.s32.totalorder %s17, 0
    %p38 = por %p36, %p37
    %p39 = scmp.ne.s32.totalorder %s25, %s26
    %p40 = scmp.eq.s32.totalorder %s18, 1
    %p41 = por %p39, %p40
    %p43 = scmp.ne.s32.totalorder %s26, %s42
    %p44 = scmp.eq.s32.totalorder %s18, 0
    %p45 = por %p43, %p44
    %s47 = sadd.s32 %s46, 1
    %p50 = scmp.eq.s32.totalorder %s12, 1
    %p51 = scmp.ne.s32.totalorder %s46, %s48
    %p52 = scmp.eq.s32.totalorder %s12, 0
    %p53 = por %p51, %p52
    %p54 = scmp.ne.s32.totalorder %s46, %s48
    %p55 = scmp.eq.s32.totalorder %s17, 1
    %p56 = por %p54, %p55
    %p57 = scmp.ne.s32.totalorder %s48, %s49
    %p58 = scmp.eq.s32.totalorder %s17, 0
    %p59 = por %p57, %p58
    %p60 = scmp.ne.s32.totalorder %s48, %s49
    %p61 = scmp.eq.s32.totalorder %s18, 1
    %p62 = por %p60, %p61
    %p64 = scmp.ne.s32.totalorder %s49, %s63
    %p65 = scmp.eq.s32.totalorder %s18, 0
    %p66 = por %p64, %p65
    %s68 = sadd.s32 %s67, 1
    %p71 = scmp.eq.s32.totalorder %s12, 1
    %p72 = scmp.ne.s32.totalorder %s67, %s69
    %p73 = scmp.eq.s32.totalorder %s12, 0
    %p74 = por %p72, %p73
    %p75 = scmp.ne.s32.totalorder %s67, %s69
    %p76 = scmp.eq.s32.totalorder %s17, 1
    %p77 = por %p75, %p76
    %p78 = scmp.ne.s32.totalorder %s69, %s70
    %p79 = scmp.eq.s32.totalorder %s17, 0
    %p80 = por %p78, %p79
    %p81 = scmp.ne.s32.totalorder %s69, %s70
    %p82 = scmp.eq.s32.totalorder %s18, 1
    %p83 = por %p81, %p82
    %p85 = scmp.ne.s32.totalorder %s70, %s84
    %p86 = scmp.eq.s32.totalorder %s18, 0
    %p87 = por %p85, %p86
    %s88 = ssub.s32 %s12, %s19
    %p89 = scmp.eq.s32.totalorder %s88, 0
    %s91 = sadd.s32 %s90, 1
    %s92 = scalar_select %p89, %s90, %s91
    %p95 = pneg %p89
    %p96 = scmp.eq.s32.totalorder %s12, 1
    %p97 = por %p95, %p96
    %p98 = scmp.ne.s32.totalorder %s90, %s93
    %p99 = scmp.eq.s32.totalorder %s12, 0
    %p100 = por %p98, %p99
    %p101 = scmp.ne.s32.totalorder %s90, %s93
    %p102 = scmp.eq.s32.totalorder %s17, 1
    %p103 = por %p101, %p102
    %p104 = scmp.ne.s32.totalorder %s93, %s94
    %p105 = scmp.eq.s32.totalorder %s17, 0
    %p106 = por %p104, %p105
    %p107 = scmp.ne.s32.totalorder %s93, %s94
    %p108 = scmp.eq.s32.totalorder %s18, 1
    %p109 = por %p107, %p108
    %p111 = scmp.ne.s32.totalorder %s94, %s110
    %p112 = scmp.eq.s32.totalorder %s18, 0
    %p113 = por %p111, %p112
    %s115 = sadd.s32 %s114, 1
    %p118 = scmp.eq.s32.totalorder %s12, 1
    %p119 = scmp.ne.s32.totalorder %s114, %s116
    %p120 = scmp.eq.s32.totalorder %s12, 0
    %p121 = por %p119, %p120
    %p122 = scmp.ne.s32.totalorder %s114, %s116
    %p123 = scmp.eq.s32.totalorder %s17, 1
    %p124 = por %p122, %p123
    %p125 = scmp.ne.s32.totalorder %s116, %s117
    %p126 = scmp.eq.s32.totalorder %s17, 0
    %p127 = por %p125, %p126
    %p128 = scmp.ne.s32.totalorder %s116, %s117
    %p129 = scmp.eq.s32.totalorder %s18, 1
    %p130 = por %p128, %p129
    %p132 = scmp.ne.s32.totalorder %s117, %s131
    %p133 = scmp.eq.s32.totalorder %s18, 0
    %p134 = por %p132, %p133
    %s135 = ssub.s32 %s12, %s19
    %p136 = scmp.eq.s32.totalorder %s135, 0
    %s138 = sadd.s32 %s137, 1
    %s139 = scalar_select %p136, %s137, %s138
    %p142 = pneg %p136
    %p143 = scmp.eq.s32.totalorder %s12, 1
    %p144 = por %p142, %p143
    %p145 = scmp.ne.s32.totalorder %s137, %s140
    %p146 = scmp.eq.s32.totalorder %s12, 0
    %p147 = por %p145, %p146
    %p148 = scmp.ne.s32.totalorder %s137, %s140
    %p149 = scmp.eq.s32.totalorder %s17, 1
    %p150 = por %p148, %p149
    %p151 = scmp.ne.s32.totalorder %s140, %s141
    %p152 = scmp.eq.s32.totalorder %s17, 0
    %p153 = por %p151, %p152
    %p154 = scmp.ne.s32.totalorder %s140, %s141
    %p155 = scmp.eq.s32.totalorder %s18, 1
    %p156 = por %p154, %p155
    %p158 = scmp.ne.s32.totalorder %s141, %s157
    %p159 = scmp.eq.s32.totalorder %s18, 0
    %p160 = por %p158, %p159
    %p161 = scmp.le.s32.totalorder 1, %s12
    %p162 = scmp.lt.s32.totalorder %s12, 3
    %p163 = pnand %p161, %p162
    %p164 = pneg %p163
    // Predicated region
    $region9: #{conditional_self_attention.1} parent=5 // pred_check
      _
    $region10: #{conditional_self_attention.1} parent=5 // pred_check_branch
      %166 = sbr.rel (%p163) target = $region12
    $region11: #{conditional_self_attention.1} parent=5 // pred_region
      %s167 = ssub.s32 %s12, 1
      // Predicated region
      $region13: #{conditional_self_attention.1} parent=11 // pred_check
        %p168 = pneg %p59
      $region14: #{conditional_self_attention.1} parent=11 // pred_check_branch
        %170 = sbr.rel (%p168) target = $region16
      $region15: #{conditional_self_attention.1} parent=11 // pred_region
        _
      $region16: #{conditional_self_attention.1} parent=11 // pred_fallthru
        _
      // Predicated region
      $region17: #{conditional_self_attention.1} parent=11 // pred_check
        %p171 = pneg %p80
      $region18: #{conditional_self_attention.1} parent=11 // pred_check_branch
        %173 = sbr.rel (%p171) target = $region20
      $region19: #{conditional_self_attention.1} parent=11 // pred_region
        _
      $region20: #{conditional_self_attention.1} parent=11 // pred_fallthru
        _
      // Predicated region
      $region21: #{conditional_self_attention.1} parent=11 // pred_check
        %p174 = pneg %p127
      $region22: #{conditional_self_attention.1} parent=11 // pred_check_branch
        %176 = sbr.rel (%p174) target = $region24
      $region23: #{conditional_self_attention.1} parent=11 // pred_region
        _
      $region24: #{conditional_self_attention.1} parent=11 // pred_fallthru
        _
    $region12: #{conditional_self_attention.1} parent=5 // pred_fallthru
      _
    %p177 = scmp.lt.s32.totalorder %s12, 2
    // Predicated region
    $region25: #{conditional_self_attention.1} parent=5 // pred_check
      %p178 = pneg %p177
    $region26: #{conditional_self_attention.1} parent=5 // pred_check_branch
      %180 = sbr.rel (%p178) target = $region28
    $region27: #{conditional_self_attention.1} parent=5 // pred_region
      // Predicated region
      $region29: #{conditional_self_attention.1} parent=27 // pred_check
        %p181 = pneg %p32
      $region30: #{conditional_self_attention.1} parent=27 // pred_check_branch
        %183 = sbr.rel (%p181) target = $region32
      $region31: #{conditional_self_attention.1} parent=27 // pred_region
        %p184 = scmp.lt.s32.totalorder %s12, 1
        %s185 = scalar_select %p184, %s12, 1
        %s186 = smul.addr %s185, 4
        %s187 = smul.addr %s186, 8
        %s188 = scalar_lea.vmem %s0, %s187
      $region32: #{conditional_self_attention.1} parent=27 // pred_fallthru
        _
      // Predicated region
      $region33: #{conditional_self_attention.1} parent=27 // pred_check
        %p189 = pneg %p100
      $region34: #{conditional_self_attention.1} parent=27 // pred_check_branch
        %191 = sbr.rel (%p189) target = $region36
      $region35: #{conditional_self_attention.1} parent=27 // pred_region
        %p192 = scmp.lt.s32.totalorder %s12, 1
        %s193 = scalar_select %p192, %s12, 1
        %s194 = smul.addr %s193, 2
        %s195 = smul.addr %s194, 2
        %s196 = scalar_lea.vmem %s3, %s195
      $region36: #{conditional_self_attention.1} parent=27 // pred_fallthru
        _
    $region28: #{conditional_self_attention.1} parent=5 // pred_fallthru
      _
    %p197 = scmp.le.s32.totalorder 1, %s12
    %p198 = scmp.lt.s32.totalorder %s12, 3
    %p199 = pnand %p197, %p198
    %p200 = pneg %p199
    // Predicated region
    $region37: #{conditional_self_attention.1} parent=5 // pred_check
      _
    $region38: #{conditional_self_attention.1} parent=5 // pred_check_branch
      %202 = sbr.rel (%p199) target = $region40
    $region39: #{conditional_self_attention.1} parent=5 // pred_region
      %s203 = ssub.s32 %s12, 1
      %p204 = scmp.lt.s32.totalorder %s17, 1
      %s205 = scalar_select %p204, %s17, 1
      %s206 = smul.addr %s205, 4
      %s207 = smul.addr %s206, 8
      %s208 = scalar_lea.vmem %s0, %s207
      %p209 = pneg %p38
      %p210 = pneg %p35
      %p211 = pneg %p59
      %p212 = pneg %p56
      %p213 = pneg %p80
      %p214 = pneg %p77
      %p215 = scmp.lt.s32.totalorder %s17, 1
      %s216 = scalar_select %p215, %s17, 1
      %s217 = smul.addr %s216, 2
      %s218 = smul.addr %s217, 2
      %s219 = scalar_lea.vmem %s3, %s218
      %p220 = pneg %p106
      %p221 = pneg %p103
      %p222 = pneg %p127
      %p223 = pneg %p124
      %p224 = pneg %p153
      %p225 = pneg %p150
      %p226 = scmp.lt.s32.totalorder %s17, 1
      %s227 = scalar_select %p226, %s17, 1
      %s228 = smul.addr %s227, 6
      %s229 = smul.addr %s228, 8
      %s230 = scalar_lea.vmem %s5, %s229
      %p231 = scmp.lt.s32.totalorder %s17, 1
      %s232 = scalar_select %p231, %s17, 1
      %s233 = smul.addr %s232, 4
      %s234 = smul.addr %s233, 8
      %s235 = scalar_lea.vmem %s0, %s234
      %p236 = scmp.lt.s32.totalorder %s17, 1
      %s237 = scalar_select %p236, %s17, 1
      %s238 = smul.addr %s237, 2
      %s239 = smul.addr %s238, 2
      %s240 = scalar_lea.vmem %s3, %s239
      %p241 = scmp.lt.s32.totalorder %s17, 1
      %s242 = scalar_select %p241, %s17, 1
      %s243 = smul.addr %s242, 6
      %s244 = smul.addr %s243, 8
      %s245 = scalar_lea.vmem %s5, %s244
      %s247 = sld [smem:[#allocation2]]
      %v248 = vld [vmem:[%s235] sm:$0xff]
      %v249 = vld [vmem:[%s235 + $0x8] sm:$0xff]
      %v250 = vld [vmem:[%s235 + $0x10] sm:$0xff]
      %v251 = vld [vmem:[%s235 + $0x18] sm:$0xff]
      %v252 = vld [vmem:[%s1] sm:$0xff]
      %v253 = vld [vmem:[%s1 + $0x8] sm:$0xff]
      %v254 = vld [vmem:[%s1 + $0x10] sm:$0xff]
      %v255 = vld [vmem:[%s1 + $0x18] sm:$0xff]
      %v256 = vld [vmem:[%s1 + $0x20] sm:$0xff]
      %v257 = vld [vmem:[%s2] sm:$0xff]
      %v258 = vld [vmem:[%s2 + $0x8] sm:$0xff]
      %v259 = vld [vmem:[%s2 + $0x10] sm:$0xff]
      %v260 = vld [vmem:[%s2 + $0x18] sm:$0xff]
      %v261 = vld [vmem:[%s2 + $0x20] sm:$0xff]
      %263 = vset.pattern.permute.xlu0 0
      %264 = vperm.xlu0 %263, %v257
      %v265 = vpop.permute.xlu0 %264
      %268 = vset.pattern.permute.xlu0 0
      %269 = vperm.xlu0 %268, %v258
      %v270 = vpop.permute.xlu0 %269
      %273 = vset.pattern.permute.xlu0 0
      %274 = vperm.xlu0 %273, %v259
      %v275 = vpop.permute.xlu0 %274
      %278 = vset.pattern.permute.xlu0 0
      %279 = vperm.xlu0 %278, %v260
      %v280 = vpop.permute.xlu0 %279
      %283 = vset.pattern.permute.xlu0 0
      %284 = vperm.xlu0 %283, %v261
      %v285 = vpop.permute.xlu0 %284
      %vm287 = vcmask 130048
      %v289 = vsel %vm287, %v252, 0
      %v292 = vsel %vm287, %v253, 0
      %v295 = vsel %vm287, %v254, 0
      %v298 = vsel %vm287, %v255, 0
      %v301 = vsel %vm287, %v256, 0
      %303 = vmatprep.subr.mxu0 0.0
      %304 = vmatpush1.msra.mxu0 0.0
      %305 = vmatprep.subr.mxu0 0.0
      %306 = vmatpush1.msra.mxu0 0.0
      %307 = vmatprep.subr.mxu0 0.0
      %308 = vmatpush1.msra.mxu0 0.0
      %309 = vmatprep.subr.mxu0 0.0
      %310 = vmatpush1.msra.mxu0 0.0
      %311 = vmatprep.subr.mxu0 0.0
      %312 = vmatpush1.msra.mxu0 0.0
      %313 = vmatprep.subr.mxu0 0.0
      %314 = vmatpush1.msra.mxu0 0.0
      %315 = vmatprep.subr.mxu0 0.0
      %316 = vmatpush1.msra.mxu0 0.0
      %317 = vmatprep.subr.mxu0 0.0
      %318 = vmatpush1.msra.mxu0 0.0
      %319 = vmatprep.subr.mxu0 0.0
      %320 = vmatpush1.msra.mxu0 0.0
      %321 = vmatprep.subr.mxu0 0.0
      %322 = vmatpush1.msra.mxu0 0.0
      %323 = vmatprep.subr.mxu0 0.0
      %324 = vmatpush1.msra.mxu0 0.0
      %325 = vmatprep.subr.mxu0 0.0
      %326 = vmatpush1.msra.mxu0 0.0
      %327 = vmatprep.subr.mxu0 0.0
      %328 = vmatpush1.msra.mxu0 0.0
      %329 = vmatprep.subr.mxu0 0.0
      %330 = vmatpush1.msra.mxu0 0.0
      %331 = vmatprep.subr.mxu0 %v251
      %332 = vmatpush1.msra.mxu0 %v250
      %333 = vmatprep.subr.mxu0 %v249
      %334 = vmatpush1.msra.mxu0 %v248
      %335 = vmatprep.subr.mxu0 0.0
      %336 = vmatpush2.msra.mxu0 0.0
      %337 = vmatprep.subr.mxu0 0.0
      %338 = vmatpush2.msra.mxu0 0.0
      %339 = vmatprep.subr.mxu0 0.0
      %340 = vmatpush2.msra.mxu0 0.0
      %341 = vmatprep.subr.mxu0 0.0
      %342 = vmatpush2.msra.mxu0 0.0
      %343 = vmatprep.subr.mxu0 0.0
      %344 = vmatpush2.msra.mxu0 0.0
      %345 = vmatprep.subr.mxu0 0.0
      %346 = vmatpush2.msra.mxu0 0.0
      %347 = vmatprep.subr.mxu0 0.0
      %348 = vmatpush2.msra.mxu0 0.0
      %349 = vmatprep.subr.mxu0 0.0
      %350 = vmatpush2.msra.mxu0 0.0
      %351 = vmatprep.subr.mxu0 0.0
      %352 = vmatpush2.msra.mxu0 0.0
      %353 = vmatprep.subr.mxu0 0.0
      %354 = vmatpush2.msra.mxu0 0.0
      %355 = vmatprep.subr.mxu0 0.0
      %356 = vmatpush2.msra.mxu0 0.0
      %357 = vmatprep.subr.mxu0 0.0
      %358 = vmatpush2.msra.mxu0 0.0
      %359 = vmatprep.subr.mxu0 0.0
      %360 = vmatpush2.msra.mxu0 0.0
      %361 = vmatprep.subr.mxu0 0.0
      %362 = vmatpush2.msra.mxu0 0.0
      %363 = vmatprep.subr.mxu0 0.0
      %364 = vmatpush2.msra.mxu0 0.0
      %365 = vmatprep.subr.mxu0 0.0
      %366 = vmatpush2.msra.mxu0 0.0
      %367 = vmatprep.mubr.f32.mxu0 0.0
      %368 = vmatmul.mubr.f32.gmra.mxu0 %v289
      %v369 = vpop.f32.mrf.mxu0
      %v370 = vadd.f32 %v265, %v369
      %v371 = vpop.f32.mrf.mxu0
      %v372 = vadd.f32 %v265, %v371
      %373 = vmatprep.mubr.f32.mxu0 0.0
      %374 = vmatmul.mubr.f32.gmra.mxu0 %v292
      %v375 = vpop.f32.mrf.mxu0
      %v376 = vadd.f32 %v270, %v375
      %v377 = vpop.f32.mrf.mxu0
      %v378 = vadd.f32 %v270, %v377
      %379 = vmatprep.mubr.f32.mxu0 0.0
      %380 = vmatmul.mubr.f32.gmra.mxu0 %v295
      %v381 = vpop.f32.mrf.mxu0
      %v382 = vadd.f32 %v275, %v381
      %v383 = vpop.f32.mrf.mxu0
      %v384 = vadd.f32 %v275, %v383
      %385 = vmatprep.mubr.f32.mxu0 0.0
      %386 = vmatmul.mubr.f32.gmra.mxu0 %v298
      %v387 = vpop.f32.mrf.mxu0
      %v388 = vadd.f32 %v280, %v387
      %v389 = vpop.f32.mrf.mxu0
      %v390 = vadd.f32 %v280, %v389
      %391 = vmatprep.mubr.f32.mxu0 0.0
      %392 = vmatmul.mubr.f32.gmra.mxu0 %v301
      %v393 = vpop.f32.mrf.mxu0
      %v394 = vadd.f32 %v285, %v393
      %v395 = vpop.f32.mrf.mxu0
      %v396 = vadd.f32 %v285, %v395
      %397 = vdwg.mxu0
      %v398 = vpack.c.bf16 %v370, %v370
      %v399 = vpack.c.bf16 %v372, %v372
      %v400 = vpack.c.bf16 %v376, %v376
      %v401 = vpack.c.bf16 %v378, %v378
      %402 = vxpose.xlu0.c.b16.start [1/8] %v398, 128
      %403 = vxpose.xlu0.c.b16.cont [2/8] 0, 128
      %404 = vxpose.xlu0.c.b16.cont [3/8] 0, 128
      %405 = vxpose.xlu0.c.b16.cont [4/8] 0, 128
      %406 = vxpose.xlu0.c.b16.cont [5/8] 0, 128
      %407 = vxpose.xlu0.c.b16.cont [6/8] 0, 128
      %408 = vxpose.xlu0.c.b16.cont [7/8] 0, 128
      %409 = vxpose.xlu0.c.b16.end [8/8] 0, 128
      %v410 = vpop.trf.xlu0
      %v411 = vpop.trf.xlu0
      %v412 = vpop.trf.xlu0
      %v413 = vpop.trf.xlu0
      %v414 = vpop.trf.xlu0
      %v415 = vpop.trf.xlu0
      %v416 = vpop.trf.xlu0
      %v417 = vpop.trf.xlu0
      %418 = vxpose.xlu0.c.b16.start [1/8] %v399, 128
      %419 = vxpose.xlu0.c.b16.cont [2/8] 0, 128
      %420 = vxpose.xlu0.c.b16.cont [3/8] 0, 128
      %421 = vxpose.xlu0.c.b16.cont [4/8] 0, 128
      %422 = vxpose.xlu0.c.b16.cont [5/8] 0, 128
      %423 = vxpose.xlu0.c.b16.cont [6/8] 0, 128
      %424 = vxpose.xlu0.c.b16.cont [7/8] 0, 128
      %425 = vxpose.xlu0.c.b16.end [8/8] 0, 128
      %v426 = vpop.trf.xlu0
      %v427 = vpop.trf.xlu0
      %v428 = vpop.trf.xlu0
      %v429 = vpop.trf.xlu0
      %v430 = vpop.trf.xlu0
      %v431 = vpop.trf.xlu0
      %v432 = vpop.trf.xlu0
      %v433 = vpop.trf.xlu0
      %vm434 = vcmask 64512
      %v436 = vsel %vm434, %v410, 0
      %v439 = vsel %vm434, %v411, 0
      %v442 = vsel %vm434, %v412, 0
      %v445 = vsel %vm434, %v413, 0
      %v448 = vsel %vm434, %v414, 0
      %v451 = vsel %vm434, %v415, 0
      %v454 = vsel %vm434, %v416, 0
      %v457 = vsel %vm434, %v417, 0
      %v460 = vsel %vm434, %v426, 0
      %v463 = vsel %vm434, %v427, 0
      %v466 = vsel %vm434, %v428, 0
      %v469 = vsel %vm434, %v429, 0
      %v472 = vsel %vm434, %v430, 0
      %v475 = vsel %vm434, %v431, 0
      %v478 = vsel %vm434, %v432, 0
      %v481 = vsel %vm434, %v433, 0
      %vm483 = vcmask 1043456
      %v485 = vsel %vm483, %v400, 0
      %v488 = vsel %vm483, %v401, 0
      %490 = vmatprep.subr.bf16.mxu0 0
      %491 = vmatpush1.bf16.msra.mxu0 0
      %492 = vmatprep.subr.bf16.mxu0 0
      %493 = vmatpush1.bf16.msra.mxu0 0
      %494 = vmatprep.subr.bf16.mxu0 0
      %495 = vmatpush1.bf16.msra.mxu0 0
      %496 = vmatprep.subr.bf16.mxu0 0
      %497 = vmatpush1.bf16.msra.mxu0 0
      %498 = vmatprep.subr.bf16.mxu0 0
      %499 = vmatpush1.bf16.msra.mxu0 0
      %500 = vmatprep.subr.bf16.mxu0 0
      %501 = vmatpush1.bf16.msra.mxu0 0
      %502 = vmatprep.subr.bf16.mxu0 0
      %503 = vmatpush1.bf16.msra.mxu0 0
      %504 = vmatprep.subr.bf16.mxu0 %v488
      %505 = vmatpush1.bf16.msra.mxu0 %v485
      %506 = vmatprep.subr.bf16.mxu0 0
      %507 = vmatpush2.bf16.msra.mxu0 0
      %508 = vmatprep.subr.bf16.mxu0 0
      %509 = vmatpush2.bf16.msra.mxu0 0
      %510 = vmatprep.subr.bf16.mxu0 0
      %511 = vmatpush2.bf16.msra.mxu0 0
      %512 = vmatprep.subr.bf16.mxu0 0
      %513 = vmatpush2.bf16.msra.mxu0 0
      %514 = vmatprep.subr.bf16.mxu0 0
      %515 = vmatpush2.bf16.msra.mxu0 0
      %516 = vmatprep.subr.bf16.mxu0 0
      %517 = vmatpush2.bf16.msra.mxu0 0
      %518 = vmatprep.subr.bf16.mxu0 0
      %519 = vmatpush2.bf16.msra.mxu0 0
      %520 = vmatprep.subr.bf16.mxu0 0
      %521 = vmatpush2.bf16.msra.mxu0 0
      %522 = vmatprep.mubr.bf16.mxu0 0
      %523 = vmatmul.mubr.bf16.gmra.mxu0 %v436
      %v524 = vpop.f32.mrf.mxu0
      %v525 = vadd.f32 0.0, %v524
      %v526 = vpop.f32.mrf.mxu0
      %v527 = vadd.f32 0.0, %v526
      %v528 = vpop.f32.mrf.mxu0
      %v529 = vadd.f32 0.0, %v528
      %v530 = vpop.f32.mrf.mxu0
      %v531 = vadd.f32 0.0, %v530
      %532 = vmatprep.mubr.bf16.mxu0 0
      %533 = vmatmul.mubr.bf16.gmra.mxu0 %v439
      %v534 = vpop.f32.mrf.mxu0
      %v535 = vadd.f32 0.0, %v534
      %v536 = vpop.f32.mrf.mxu0
      %v537 = vadd.f32 0.0, %v536
      %v538 = vpop.f32.mrf.mxu0
      %v539 = vadd.f32 0.0, %v538
      %v540 = vpop.f32.mrf.mxu0
      %v541 = vadd.f32 0.0, %v540
      %542 = vmatprep.mubr.bf16.mxu0 0
      %543 = vmatmul.mubr.bf16.gmra.mxu0 %v442
      %v544 = vpop.f32.mrf.mxu0
      %v545 = vadd.f32 0.0, %v544
      %v546 = vpop.f32.mrf.mxu0
      %v547 = vadd.f32 0.0, %v546
      %v548 = vpop.f32.mrf.mxu0
      %v549 = vadd.f32 0.0, %v548
      %v550 = vpop.f32.mrf.mxu0
      %v551 = vadd.f32 0.0, %v550
      %552 = vmatprep.mubr.bf16.mxu0 0
      %553 = vmatmul.mubr.bf16.gmra.mxu0 %v445
      %v554 = vpop.f32.mrf.mxu0
      %v555 = vadd.f32 0.0, %v554
      %v556 = vpop.f32.mrf.mxu0
      %v557 = vadd.f32 0.0, %v556
      %v558 = vpop.f32.mrf.mxu0
      %v559 = vadd.f32 0.0, %v558
      %v560 = vpop.f32.mrf.mxu0
      %v561 = vadd.f32 0.0, %v560
      %562 = vmatprep.mubr.bf16.mxu0 0
      %563 = vmatmul.mubr.bf16.gmra.mxu0 %v448
      %v564 = vpop.f32.mrf.mxu0
      %v565 = vadd.f32 0.0, %v564
      %v566 = vpop.f32.mrf.mxu0
      %v567 = vadd.f32 0.0, %v566
      %v568 = vpop.f32.mrf.mxu0
      %v569 = vadd.f32 0.0, %v568
      %v570 = vpop.f32.mrf.mxu0
      %v571 = vadd.f32 0.0, %v570
      %572 = vmatprep.mubr.bf16.mxu0 0
      %573 = vmatmul.mubr.bf16.gmra.mxu0 %v451
      %v574 = vpop.f32.mrf.mxu0
      %v575 = vadd.f32 0.0, %v574
      %v576 = vpop.f32.mrf.mxu0
      %v577 = vadd.f32 0.0, %v576
      %v578 = vpop.f32.mrf.mxu0
      %v579 = vadd.f32 0.0, %v578
      %v580 = vpop.f32.mrf.mxu0
      %v581 = vadd.f32 0.0, %v580
      %582 = vmatprep.mubr.bf16.mxu0 0
      %583 = vmatmul.mubr.bf16.gmra.mxu0 %v454
      %v584 = vpop.f32.mrf.mxu0
      %v585 = vadd.f32 0.0, %v584
      %v586 = vpop.f32.mrf.mxu0
      %v587 = vadd.f32 0.0, %v586
      %v588 = vpop.f32.mrf.mxu0
      %v589 = vadd.f32 0.0, %v588
      %v590 = vpop.f32.mrf.mxu0
      %v591 = vadd.f32 0.0, %v590
      %592 = vmatprep.mubr.bf16.mxu0 0
      %593 = vmatmul.mubr.bf16.gmra.mxu0 %v457
      %v594 = vpop.f32.mrf.mxu0
      %v595 = vadd.f32 0.0, %v594
      %v596 = vpop.f32.mrf.mxu0
      %v597 = vadd.f32 0.0, %v596
      %v598 = vpop.f32.mrf.mxu0
      %v599 = vadd.f32 0.0, %v598
      %v600 = vpop.f32.mrf.mxu0
      %v601 = vadd.f32 0.0, %v600
      %602 = vmatprep.mubr.bf16.mxu0 0
      %603 = vmatmul.mubr.bf16.gmra.mxu0 %v460
      %v604 = vpop.f32.mrf.mxu0
      %v605 = vadd.f32 0.0, %v604
      %v606 = vpop.f32.mrf.mxu0
      %v607 = vadd.f32 0.0, %v606
      %v608 = vpop.f32.mrf.mxu0
      %v609 = vadd.f32 0.0, %v608
      %v610 = vpop.f32.mrf.mxu0
      %v611 = vadd.f32 0.0, %v610
      %612 = vmatprep.mubr.bf16.mxu0 0
      %613 = vmatmul.mubr.bf16.gmra.mxu0 %v463
      %v614 = vpop.f32.mrf.mxu0
      %v615 = vadd.f32 0.0, %v614
      %v616 = vpop.f32.mrf.mxu0
      %v617 = vadd.f32 0.0, %v616
      %v618 = vpop.f32.mrf.mxu0
      %v619 = vadd.f32 0.0, %v618
      %v620 = vpop.f32.mrf.mxu0
      %v621 = vadd.f32 0.0, %v620
      %622 = vmatprep.mubr.bf16.mxu0 0
      %623 = vmatmul.mubr.bf16.gmra.mxu0 %v466
      %v624 = vpop.f32.mrf.mxu0
      %v625 = vadd.f32 0.0, %v624
      %v626 = vpop.f32.mrf.mxu0
      %v627 = vadd.f32 0.0, %v626
      %v628 = vpop.f32.mrf.mxu0
      %v629 = vadd.f32 0.0, %v628
      %v630 = vpop.f32.mrf.mxu0
      %v631 = vadd.f32 0.0, %v630
      %632 = vmatprep.mubr.bf16.mxu0 0
      %633 = vmatmul.mubr.bf16.gmra.mxu0 %v469
      %v634 = vpop.f32.mrf.mxu0
      %v635 = vadd.f32 0.0, %v634
      %v636 = vpop.f32.mrf.mxu0
      %v637 = vadd.f32 0.0, %v636
      %v638 = vpop.f32.mrf.mxu0
      %v639 = vadd.f32 0.0, %v638
      %v640 = vpop.f32.mrf.mxu0
      %v641 = vadd.f32 0.0, %v640
      %642 = vmatprep.mubr.bf16.mxu0 0
      %643 = vmatmul.mubr.bf16.gmra.mxu0 %v472
      %v644 = vpop.f32.mrf.mxu0
      %v645 = vadd.f32 0.0, %v644
      %v646 = vpop.f32.mrf.mxu0
      %v647 = vadd.f32 0.0, %v646
      %v648 = vpop.f32.mrf.mxu0
      %v649 = vadd.f32 0.0, %v648
      %v650 = vpop.f32.mrf.mxu0
      %v651 = vadd.f32 0.0, %v650
      %652 = vmatprep.mubr.bf16.mxu0 0
      %653 = vmatmul.mubr.bf16.gmra.mxu0 %v475
      %v654 = vpop.f32.mrf.mxu0
      %v655 = vadd.f32 0.0, %v654
      %v656 = vpop.f32.mrf.mxu0
      %v657 = vadd.f32 0.0, %v656
      %v658 = vpop.f32.mrf.mxu0
      %v659 = vadd.f32 0.0, %v658
      %v660 = vpop.f32.mrf.mxu0
      %v661 = vadd.f32 0.0, %v660
      %662 = vmatprep.mubr.bf16.mxu0 0
      %663 = vmatmul.mubr.bf16.gmra.mxu0 %v478
      %v664 = vpop.f32.mrf.mxu0
      %v665 = vadd.f32 0.0, %v664
      %v666 = vpop.f32.mrf.mxu0
      %v667 = vadd.f32 0.0, %v666
      %v668 = vpop.f32.mrf.mxu0
      %v669 = vadd.f32 0.0, %v668
      %v670 = vpop.f32.mrf.mxu0
      %v671 = vadd.f32 0.0, %v670
      %672 = vmatprep.mubr.bf16.mxu0 0
      %673 = vmatmul.mubr.bf16.gmra.mxu0 %v481
      %v674 = vpop.f32.mrf.mxu0
      %v675 = vadd.f32 0.0, %v674
      %v676 = vpop.f32.mrf.mxu0
      %v677 = vadd.f32 0.0, %v676
      %v678 = vpop.f32.mrf.mxu0
      %v679 = vadd.f32 0.0, %v678
      %v680 = vpop.f32.mrf.mxu0
      %v681 = vadd.f32 0.0, %v680
      %682 = vdwg.mxu0
      %v683 = vmax.f32 %v525, %v527
      %684 = vmax.xlane.f32.xlu0 %v683
      %v685 = vpop.xlane.xlu0 %684
      %v686 = vmax.f32 %v529, %v531
      %687 = vmax.xlane.f32.xlu0 %v686
      %v688 = vpop.xlane.xlu0 %687
      %v689 = vmax.f32 %v535, %v537
      %690 = vmax.xlane.f32.xlu0 %v689
      %v691 = vpop.xlane.xlu0 %690
      %v692 = vmax.f32 %v539, %v541
      %693 = vmax.xlane.f32.xlu0 %v692
      %v694 = vpop.xlane.xlu0 %693
      %v695 = vmax.f32 %v545, %v547
      %696 = vmax.xlane.f32.xlu0 %v695
      %v697 = vpop.xlane.xlu0 %696
      %v698 = vmax.f32 %v549, %v551
      %699 = vmax.xlane.f32.xlu0 %v698
      %v700 = vpop.xlane.xlu0 %699
      %v701 = vmax.f32 %v555, %v557
      %702 = vmax.xlane.f32.xlu0 %v701
      %v703 = vpop.xlane.xlu0 %702
      %v704 = vmax.f32 %v559, %v561
      %705 = vmax.xlane.f32.xlu0 %v704
      %v706 = vpop.xlane.xlu0 %705
      %v707 = vmax.f32 %v565, %v567
      %708 = vmax.xlane.f32.xlu0 %v707
      %v709 = vpop.xlane.xlu0 %708
      %v710 = vmax.f32 %v569, %v571
      %711 = vmax.xlane.f32.xlu0 %v710
      %v712 = vpop.xlane.xlu0 %711
      %v713 = vmax.f32 %v575, %v577
      %714 = vmax.xlane.f32.xlu0 %v713
      %v715 = vpop.xlane.xlu0 %714
      %v716 = vmax.f32 %v579, %v581
      %717 = vmax.xlane.f32.xlu0 %v716
      %v718 = vpop.xlane.xlu0 %717
      %v719 = vmax.f32 %v585, %v587
      %720 = vmax.xlane.f32.xlu0 %v719
      %v721 = vpop.xlane.xlu0 %720
      %v722 = vmax.f32 %v589, %v591
      %723 = vmax.xlane.f32.xlu0 %v722
      %v724 = vpop.xlane.xlu0 %723
      %v725 = vmax.f32 %v595, %v597
      %726 = vmax.xlane.f32.xlu0 %v725
      %v727 = vpop.xlane.xlu0 %726
      %v728 = vmax.f32 %v599, %v601
      %729 = vmax.xlane.f32.xlu0 %v728
      %v730 = vpop.xlane.xlu0 %729
      %v731 = vmax.f32 %v605, %v607
      %732 = vmax.xlane.f32.xlu0 %v731
      %v733 = vpop.xlane.xlu0 %732
      %v734 = vmax.f32 %v609, %v611
      %735 = vmax.xlane.f32.xlu0 %v734
      %v736 = vpop.xlane.xlu0 %735
      %v737 = vmax.f32 %v615, %v617
      %738 = vmax.xlane.f32.xlu0 %v737
      %v739 = vpop.xlane.xlu0 %738
      %v740 = vmax.f32 %v619, %v621
      %741 = vmax.xlane.f32.xlu0 %v740
      %v742 = vpop.xlane.xlu0 %741
      %v743 = vmax.f32 %v625, %v627
      %744 = vmax.xlane.f32.xlu0 %v743
      %v745 = vpop.xlane.xlu0 %744
      %v746 = vmax.f32 %v629, %v631
      %747 = vmax.xlane.f32.xlu0 %v746
      %v748 = vpop.xlane.xlu0 %747
      %v749 = vmax.f32 %v635, %v637
      %750 = vmax.xlane.f32.xlu0 %v749
      %v751 = vpop.xlane.xlu0 %750
      %v752 = vmax.f32 %v639, %v641
      %753 = vmax.xlane.f32.xlu0 %v752
      %v754 = vpop.xlane.xlu0 %753
      %v755 = vmax.f32 %v645, %v647
      %756 = vmax.xlane.f32.xlu0 %v755
      %v757 = vpop.xlane.xlu0 %756
      %v758 = vmax.f32 %v649, %v651
      %759 = vmax.xlane.f32.xlu0 %v758
      %v760 = vpop.xlane.xlu0 %759
      %v761 = vmax.f32 %v655, %v657
      %762 = vmax.xlane.f32.xlu0 %v761
      %v763 = vpop.xlane.xlu0 %762
      %v764 = vmax.f32 %v659, %v661
      %765 = vmax.xlane.f32.xlu0 %v764
      %v766 = vpop.xlane.xlu0 %765
      %v767 = vmax.f32 %v665, %v667
      %768 = vmax.xlane.f32.xlu0 %v767
      %v769 = vpop.xlane.xlu0 %768
      %v770 = vmax.f32 %v669, %v671
      %771 = vmax.xlane.f32.xlu0 %v770
      %v772 = vpop.xlane.xlu0 %771
      %v773 = vmax.f32 %v675, %v677
      %774 = vmax.xlane.f32.xlu0 %v773
      %v775 = vpop.xlane.xlu0 %774
      %v776 = vmax.f32 %v679, %v681
      %777 = vmax.xlane.f32.xlu0 %v776
      %v778 = vpop.xlane.xlu0 %777
      %v779 = vsub.f32 %v525, %v685
      %v780 = vsub.f32 %v527, %v685
      %v781 = vsub.f32 %v529, %v688
      %v782 = vsub.f32 %v531, %v688
      %v783 = vsub.f32 %v535, %v691
      %v784 = vsub.f32 %v537, %v691
      %v785 = vsub.f32 %v539, %v694
      %v786 = vsub.f32 %v541, %v694
      %v787 = vsub.f32 %v545, %v697
      %v788 = vsub.f32 %v547, %v697
      %v789 = vsub.f32 %v549, %v700
      %v790 = vsub.f32 %v551, %v700
      %v791 = vsub.f32 %v555, %v703
      %v792 = vsub.f32 %v557, %v703
      %v793 = vsub.f32 %v559, %v706
      %v794 = vsub.f32 %v561, %v706
      %v795 = vsub.f32 %v565, %v709
      %v796 = vsub.f32 %v567, %v709
      %v797 = vsub.f32 %v569, %v712
      %v798 = vsub.f32 %v571, %v712
      %v799 = vsub.f32 %v575, %v715
      %v800 = vsub.f32 %v577, %v715
      %v801 = vsub.f32 %v579, %v718
      %v802 = vsub.f32 %v581, %v718
      %v803 = vsub.f32 %v585, %v721
      %v804 = vsub.f32 %v587, %v721
      %v805 = vsub.f32 %v589, %v724
      %v806 = vsub.f32 %v591, %v724
      %v807 = vsub.f32 %v595, %v727
      %v808 = vsub.f32 %v597, %v727
      %v809 = vsub.f32 %v599, %v730
      %v810 = vsub.f32 %v601, %v730
      %v811 = vsub.f32 %v605, %v733
      %v812 = vsub.f32 %v607, %v733
      %v813 = vsub.f32 %v609, %v736
      %v814 = vsub.f32 %v611, %v736
      %v815 = vsub.f32 %v615, %v739
      %v816 = vsub.f32 %v617, %v739
      %v817 = vsub.f32 %v619, %v742
      %v818 = vsub.f32 %v621, %v742
      %v819 = vsub.f32 %v625, %v745
      %v820 = vsub.f32 %v627, %v745
      %v821 = vsub.f32 %v629, %v748
      %v822 = vsub.f32 %v631, %v748
      %v823 = vsub.f32 %v635, %v751
      %v824 = vsub.f32 %v637, %v751
      %v825 = vsub.f32 %v639, %v754
      %v826 = vsub.f32 %v641, %v754
      %v827 = vsub.f32 %v645, %v757
      %v828 = vsub.f32 %v647, %v757
      %v829 = vsub.f32 %v649, %v760
      %v830 = vsub.f32 %v651, %v760
      %v831 = vsub.f32 %v655, %v763
      %v832 = vsub.f32 %v657, %v763
      %v833 = vsub.f32 %v659, %v766
      %v834 = vsub.f32 %v661, %v766
      %v835 = vsub.f32 %v665, %v769
      %v836 = vsub.f32 %v667, %v769
      %v837 = vsub.f32 %v669, %v772
      %v838 = vsub.f32 %v671, %v772
      %v839 = vsub.f32 %v675, %v775
      %v840 = vsub.f32 %v677, %v775
      %v841 = vsub.f32 %v679, %v778
      %v842 = vsub.f32 %v681, %v778
      %v843 = vmul.f32 %v779, 1.442695
      %v844 = vpow.pop %v843
      %v845 = vmul.f32 %v780, 1.442695
      %v846 = vpow.pop %v845
      %v847 = vmul.f32 %v781, 1.442695
      %v848 = vpow.pop %v847
      %v849 = vmul.f32 %v782, 1.442695
      %v850 = vpow.pop %v849
      %v851 = vmul.f32 %v783, 1.442695
      %v852 = vpow.pop %v851
      %v853 = vmul.f32 %v784, 1.442695
      %v854 = vpow.pop %v853
      %v855 = vmul.f32 %v785, 1.442695
      %v856 = vpow.pop %v855
      %v857 = vmul.f32 %v786, 1.442695
      %v858 = vpow.pop %v857
      %v859 = vmul.f32 %v787, 1.442695
      %v860 = vpow.pop %v859
      %v861 = vmul.f32 %v788, 1.442695
      %v862 = vpow.pop %v861
      %v863 = vmul.f32 %v789, 1.442695
      %v864 = vpow.pop %v863
      %v865 = vmul.f32 %v790, 1.442695
      %v866 = vpow.pop %v865
      %v867 = vmul.f32 %v791, 1.442695
      %v868 = vpow.pop %v867
      %v869 = vmul.f32 %v792, 1.442695
      %v870 = vpow.pop %v869
      %v871 = vmul.f32 %v793, 1.442695
      %v872 = vpow.pop %v871
      %v873 = vmul.f32 %v794, 1.442695
      %v874 = vpow.pop %v873
      %v875 = vmul.f32 %v795, 1.442695
      %v876 = vpow.pop %v875
      %v877 = vmul.f32 %v796, 1.442695
      %v878 = vpow.pop %v877
      %v879 = vmul.f32 %v797, 1.442695
      %v880 = vpow.pop %v879
      %v881 = vmul.f32 %v798, 1.442695
      %v882 = vpow.pop %v881
      %v883 = vmul.f32 %v799, 1.442695
      %v884 = vpow.pop %v883
      %v885 = vmul.f32 %v800, 1.442695
      %v886 = vpow.pop %v885
      %v887 = vmul.f32 %v801, 1.442695
      %v888 = vpow.pop %v887
      %v889 = vmul.f32 %v802, 1.442695
      %v890 = vpow.pop %v889
      %v891 = vmul.f32 %v803, 1.442695
      %v892 = vpow.pop %v891
      %v893 = vmul.f32 %v804, 1.442695
      %v894 = vpow.pop %v893
      %v895 = vmul.f32 %v805, 1.442695
      %v896 = vpow.pop %v895
      %v897 = vmul.f32 %v806, 1.442695
      %v898 = vpow.pop %v897
      %v899 = vmul.f32 %v807, 1.442695
      %v900 = vpow.pop %v899
      %v901 = vmul.f32 %v808, 1.442695
      %v902 = vpow.pop %v901
      %v903 = vmul.f32 %v809, 1.442695
      %v904 = vpow.pop %v903
      %v905 = vmul.f32 %v810, 1.442695
      %v906 = vpow.pop %v905
      %v907 = vmul.f32 %v811, 1.442695
      %v908 = vpow.pop %v907
      %v909 = vmul.f32 %v812, 1.442695
      %v910 = vpow.pop %v909
      %v911 = vmul.f32 %v813, 1.442695
      %v912 = vpow.pop %v911
      %v913 = vmul.f32 %v814, 1.442695
      %v914 = vpow.pop %v913
      %v915 = vmul.f32 %v815, 1.442695
      %v916 = vpow.pop %v915
      %v917 = vmul.f32 %v816, 1.442695
      %v918 = vpow.pop %v917
      %v919 = vmul.f32 %v817, 1.442695
      %v920 = vpow.pop %v919
      %v921 = vmul.f32 %v818, 1.442695
      %v922 = vpow.pop %v921
      %v923 = vmul.f32 %v819, 1.442695
      %v924 = vpow.pop %v923
      %v925 = vmul.f32 %v820, 1.442695
      %v926 = vpow.pop %v925
      %v927 = vmul.f32 %v821, 1.442695
      %v928 = vpow.pop %v927
      %v929 = vmul.f32 %v822, 1.442695
      %v930 = vpow.pop %v929
      %v931 = vmul.f32 %v823, 1.442695
      %v932 = vpow.pop %v931
      %v933 = vmul.f32 %v824, 1.442695
      %v934 = vpow.pop %v933
      %v935 = vmul.f32 %v825, 1.442695
      %v936 = vpow.pop %v935
      %v937 = vmul.f32 %v826, 1.442695
      %v938 = vpow.pop %v937
      %v939 = vmul.f32 %v827, 1.442695
      %v940 = vpow.pop %v939
      %v941 = vmul.f32 %v828, 1.442695
      %v942 = vpow.pop %v941
      %v943 = vmul.f32 %v829, 1.442695
      %v944 = vpow.pop %v943
      %v945 = vmul.f32 %v830, 1.442695
      %v946 = vpow.pop %v945
      %v947 = vmul.f32 %v831, 1.442695
      %v948 = vpow.pop %v947
      %v949 = vmul.f32 %v832, 1.442695
      %v950 = vpow.pop %v949
      %v951 = vmul.f32 %v833, 1.442695
      %v952 = vpow.pop %v951
      %v953 = vmul.f32 %v834, 1.442695
      %v954 = vpow.pop %v953
      %v955 = vmul.f32 %v835, 1.442695
      %v956 = vpow.pop %v955
      %v957 = vmul.f32 %v836, 1.442695
      %v958 = vpow.pop %v957
      %v959 = vmul.f32 %v837, 1.442695
      %v960 = vpow.pop %v959
      %v961 = vmul.f32 %v838, 1.442695
      %v962 = vpow.pop %v961
      %v963 = vmul.f32 %v839, 1.442695
      %v964 = vpow.pop %v963
      %v965 = vmul.f32 %v840, 1.442695
      %v966 = vpow.pop %v965
      %v967 = vmul.f32 %v841, 1.442695
      %v968 = vpow.pop %v967
      %v969 = vmul.f32 %v842, 1.442695
      %v970 = vpow.pop %v969
      %v971 = vpack.c.bf16 %v848, %v844
      %v972 = vpack.c.bf16 %v850, %v846
      %v973 = vpack.c.bf16 %v856, %v852
      %v974 = vpack.c.bf16 %v858, %v854
      %v975 = vpack.c.bf16 %v864, %v860
      %v976 = vpack.c.bf16 %v866, %v862
      %v977 = vpack.c.bf16 %v872, %v868
      %v978 = vpack.c.bf16 %v874, %v870
      %v979 = vpack.c.bf16 %v880, %v876
      %v980 = vpack.c.bf16 %v882, %v878
      %v981 = vpack.c.bf16 %v888, %v884
      %v982 = vpack.c.bf16 %v890, %v886
      %v983 = vpack.c.bf16 %v896, %v892
      %v984 = vpack.c.bf16 %v898, %v894
      %v985 = vpack.c.bf16 %v904, %v900
      %v986 = vpack.c.bf16 %v906, %v902
      %v987 = vpack.c.bf16 %v912, %v908
      %v988 = vpack.c.bf16 %v914, %v910
      %v989 = vpack.c.bf16 %v920, %v916
      %v990 = vpack.c.bf16 %v922, %v918
      %v991 = vpack.c.bf16 %v928, %v924
      %v992 = vpack.c.bf16 %v930, %v926
      %v993 = vpack.c.bf16 %v936, %v932
      %v994 = vpack.c.bf16 %v938, %v934
      %v995 = vpack.c.bf16 %v944, %v940
      %v996 = vpack.c.bf16 %v946, %v942
      %v997 = vpack.c.bf16 %v952, %v948
      %v998 = vpack.c.bf16 %v954, %v950
      %v999 = vpack.c.bf16 %v960, %v956
      %v1000 = vpack.c.bf16 %v962, %v958
      %v1001 = vpack.c.bf16 %v968, %v964
      %v1002 = vpack.c.bf16 %v970, %v966
      %v1003 = vpack.c.bf16 %v388, %v382
      %v1004 = vpack.c.bf16 %v390, %v384
      %v1005 = vpack.c.bf16 %v394, %v394
      %v1006 = vpack.c.bf16 %v396, %v396
      %1007 = vmatprep.subr.bf16.mxu0 %v986
      %1008 = vmatpush1.bf16.xpose.msra.mxu0 %v985
      %1009 = vmatprep.subr.bf16.mxu0 %v984
      %1010 = vmatpush1.bf16.xpose.msra.mxu0 %v983
      %1011 = vmatprep.subr.bf16.mxu0 %v982
      %1012 = vmatpush1.bf16.xpose.msra.mxu0 %v981
      %1013 = vmatprep.subr.bf16.mxu0 %v980
      %1014 = vmatpush1.bf16.xpose.msra.mxu0 %v979
      %1015 = vmatprep.subr.bf16.mxu0 %v978
      %1016 = vmatpush1.bf16.xpose.msra.mxu0 %v977
      %1017 = vmatprep.subr.bf16.mxu0 %v976
      %1018 = vmatpush1.bf16.xpose.msra.mxu0 %v975
      %1019 = vmatprep.subr.bf16.mxu0 %v974
      %1020 = vmatpush1.bf16.xpose.msra.mxu0 %v973
      %1021 = vmatprep.subr.bf16.mxu0 %v972
      %1022 = vmatpush1.bf16.xpose.msra.mxu0 %v971
      %1023 = vmatprep.subr.bf16.mxu0 %v1002
      %1024 = vmatpush2.bf16.xpose.msra.mxu0 %v1001
      %1025 = vmatprep.subr.bf16.mxu0 %v1000
      %1026 = vmatpush2.bf16.xpose.msra.mxu0 %v999
      %1027 = vmatprep.subr.bf16.mxu0 %v998
      %1028 = vmatpush2.bf16.xpose.msra.mxu0 %v997
      %1029 = vmatprep.subr.bf16.mxu0 %v996
      %1030 = vmatpush2.bf16.xpose.msra.mxu0 %v995
      %1031 = vmatprep.subr.bf16.mxu0 %v994
      %1032 = vmatpush2.bf16.xpose.msra.mxu0 %v993
      %1033 = vmatprep.subr.bf16.mxu0 %v992
      %1034 = vmatpush2.bf16.xpose.msra.mxu0 %v991
      %1035 = vmatprep.subr.bf16.mxu0 %v990
      %1036 = vmatpush2.bf16.xpose.msra.mxu0 %v989
      %1037 = vmatprep.subr.bf16.mxu0 %v988
      %1038 = vmatpush2.bf16.xpose.msra.mxu0 %v987
      %1039 = vmatprep.mubr.bf16.mxu0 %v1004
      %1040 = vmatmul.mubr.bf16.gmra.mxu0 %v1003
      %v1041 = vpop.f32.mrf.mxu0
      %v1042 = vadd.f32 0.0, %v1041
      %v1043 = vpop.f32.mrf.mxu0
      %v1044 = vadd.f32 0.0, %v1043
      %v1045 = vpop.f32.mrf.mxu0
      %v1046 = vadd.f32 0.0, %v1045
      %v1047 = vpop.f32.mrf.mxu0
      %v1048 = vadd.f32 0.0, %v1047
      %1049 = vmatprep.mubr.bf16.mxu0 %v1006
      %1050 = vmatmul.mubr.bf16.gmra.mxu0 %v1005
      %v1051 = vpop.f32.mrf.mxu0
      %v1052 = vadd.f32 0.0, %v1051
      %v1053 = vpop.f32.mrf.mxu0
      %v1054 = vadd.f32 0.0, %v1053
      %v1055 = vpop.f32.mrf.mxu0
      %v1056 = vpop.f32.mrf.mxu0
      %1057 = vdwg.mxu0
      %v1058 = vrcp.pop %v1052
      %v1059 = vrcp.pop %v1054
      %v1060 = vlaneseq
      %v1061 = vshrl.u32 %v1060, 7
      %v1062 = vsub.s32 0, %v1061
      %v1063 = vrot.slane %v1058, %v1062
      %v1064 = vlaneseq
      %v1065 = vshrl.u32 %v1064, 7
      %v1066 = vsub.s32 0, %v1065
      %v1067 = vrot.slane %v1059, %v1066
      %v1068 = vmul.f32 %v1042, %v1063
      %v1069 = vmul.f32 %v1044, %v1067
      %v1070 = vmul.f32 %v1046, %v1063
      %v1071 = vmul.f32 %v1048, %v1067
      %v1072 = vstv %s247
      %v1073 = vmul.f32 %v1072, %v1068
      %v1074 = vmul.f32 %v1072, %v1069
      %v1075 = vmul.f32 %v1072, %v1070
      %v1076 = vmul.f32 %v1072, %v1071
      %v1077 = vadd.f32 %v1073, %v248
      %v1078 = vadd.f32 %v1074, %v249
      %v1079 = vadd.f32 %v1075, %v250
      %v1080 = vadd.f32 %v1076, %v251
      %1081 = vst [vmem:[%s245] sm:$0xff] %v1077
      %1082 = vst [vmem:[%s245 + $0x8] sm:$0xff] %v1078
      %1083 = vst [vmem:[%s245 + $0x10] sm:$0xff] %v1079
      %1084 = vst [vmem:[%s245 + $0x18] sm:$0xff] %v1080
      %v1085 = vld [vmem:[%s240] sm:$0xf]
      %v1088 = vunpack.c.l.s4 1983009808
      %v1089 = vunpack.c.0.s8 %v1088
      %v1090 = vlaneseq
      %v1091 = vshrl.u32 %v1090, 7
      %v1092 = vsub.s32 %v1089, %v1091
      %v1093 = vrot.slane %v1085, %v1092
      %v1094 = vcombine.high %v1093, %v1093
      %1097 = vst [vmem:[%s245 + $0x20] sm:$0x3] %v1093
      %1098 = vst [vmem:[%s245 + $0x28] sm:$0x3] %v1094
      %p1099 = scmp.lt.s32.totalorder %s17, 1
      %s1100 = scalar_select %p1099, %s17, 1
      %s1101 = smul.addr %s1100, 6
      %s1102 = smul.addr %s1101, 8
      %s1103 = scalar_lea.vmem %s5, %s1102
      // Predicated region
      $region41: #{conditional_self_attention.1} parent=39 // pred_check
        %p1104 = pneg %p150
      $region42: #{conditional_self_attention.1} parent=39 // pred_check_branch
        %1106 = sbr.rel (%p1104) target = $region44
      $region43: #{conditional_self_attention.1} parent=39 // pred_region
        _
      $region44: #{conditional_self_attention.1} parent=39 // pred_fallthru
        _
    $region40: #{conditional_self_attention.1} parent=5 // pred_fallthru
      _
    %p1107 = scmp.le.s32.totalorder 2, %s12
    // Predicated region
    $region45: #{conditional_self_attention.1} parent=5 // pred_check
      %p1108 = pneg %p1107
    $region46: #{conditional_self_attention.1} parent=5 // pred_check_branch
      %1110 = sbr.rel (%p1108) target = $region48
    $region47: #{conditional_self_attention.1} parent=5 // pred_region
      %s1111 = ssub.s32 %s12, 2
      // Predicated region
      $region49: #{conditional_self_attention.1} parent=47 // pred_check
        %p1112 = pneg %p156
      $region50: #{conditional_self_attention.1} parent=47 // pred_check_branch
        %1114 = sbr.rel (%p1112) target = $region52
      $region51: #{conditional_self_attention.1} parent=47 // pred_region
        %p1115 = scmp.lt.s32.totalorder %s18, 1
        %s1116 = scalar_select %p1115, %s18, 1
        %s1117 = smul.addr %s1116, 6
        %s1118 = smul.addr %s1117, 8
        %s1119 = scalar_lea.vmem %s5, %s1118
      $region52: #{conditional_self_attention.1} parent=47 // pred_fallthru
        _
    $region48: #{conditional_self_attention.1} parent=5 // pred_fallthru
      _
  $region6: #{conditional_self_attention.1} parent=0 // loop_footer
    %s16 = sadd.s32 1, %s12
  $region7: #{conditional_self_attention.1} parent=0 // loop_footer_branch
    %11 = sbr.rel target = $region3
  $region8: #{conditional_self_attention.1} parent=0 // loop_exit
    _

</llo_original>
